<compile_context>
chip_gen: v7x
topology: tpu7x:2x2x1
jax: 0.10.0
libtpu: 0.0.40
codegen_flags: <defaults>
</compile_context>

<pallas_src>
import functools

import jax
import jax.numpy as jnp
from jax import lax
from jax.experimental import pallas as pl
from jax.experimental.pallas import tpu as pltpu


def _deconv_matmul_kernel(p_ref, w_ref, b_ref, o_ref):
    """One (batch, depth-tile) step: fused polyphase matmul + bias + ReLU.

    p_ref: (1, TD*H*W, 8*C_in)   im2col patch (K axis ordered dd, dh, dw, ci)
    w_ref: (8*C_in, 8*C_out)     fused polyphase weight
    b_ref: (1, 8*C_out)          bias tiled over the 8 output parity classes
    o_ref: (1, TD*H*W, 8*C_out)  sub-pixel output (pd, ph, pw, co on lanes)
    """
    y = jnp.dot(p_ref[0], w_ref[...], preferred_element_type=jnp.float32)
    y = jnp.maximum(y + b_ref[...], 0.0)              # bias + ReLU
    o_ref[0] = y.astype(o_ref.dtype)


_VMEM_BUDGET = 24 * 1024 * 1024   # headroom under v7x's 32 MiB scoped default


def _pick_depth_tile(D, H, W, C_in, C_out, budget=_VMEM_BUDGET):
    """Largest divisor of D whose double-buffered in/out blocks fit `budget`."""
    lane = 128
    k_lanes = max(8 * C_in, lane)       # VMEM lane-pads last dims to 128
    n_lanes = max(8 * C_out, lane)
    w_bytes = 8 * C_in * n_lanes * 4
    for td in range(D, 0, -1):
        if D % td:
            continue
        rows = td * H * W
        in_b = rows * k_lanes * 4
        out_b = rows * n_lanes * 4
        if 2 * (in_b + out_b) + w_bytes <= budget:    # 2x = double buffering
            return td
    return 1


def deconv3d_block(x_ncdhw, weight, bias, *, depth_tile=None,
                   compute_dtype=jnp.float32):
    """ConvTranspose3d(kernel=3, stride=2, padding=1, output_padding=1) + ReLU.

    x_ncdhw: (N, C_in, D, H, W)
    weight : (C_in, C_out, 3, 3, 3)   (PyTorch ConvTranspose3d layout)
    bias   : (C_out,)
    returns: (N, C_out, 2D, 2H, 2W) float32
    """
    N, C_in, D, H, W = x_ncdhw.shape
    assert weight.shape[0] == C_in and weight.shape[2:] == (3, 3, 3)
    C_out = weight.shape[1]
    assert (H * W) % 8 == 0, "H*W must stay a sublane multiple for clean tiling"
    # (8*C_out % 128 == 0 keeps the output store lane-dense; smaller still works,
    #  just with masked partial stores.)

    TD = depth_tile if depth_tile is not None else _pick_depth_tile(
        D, H, W, C_in, C_out)
    assert D % TD == 0

    # ---------------- XLA glue: im2col patch (hoisted out of the kernel) -------
    # ConvTranspose3d(k=3, s=2, p=1, op=1): per dim, output parity p uses input
    # offsets d in {0,1}: (p=0,d=0)->k=1, (p=1,d=0)->k=2, (p=1,d=1)->k=0;
    # (p=0,d=1) is invalid.  The +1 high plane/row/col is zero padding.
    x_nd = jnp.transpose(x_ncdhw, (0, 2, 3, 4, 1)).astype(jnp.float32)   # NDHWC
    x_pad = jnp.pad(x_nd, ((0, 0), (0, 1), (0, 1), (0, 1), (0, 0)))
    pieces = []
    for dd in (0, 1):                 # K-axis order must match w_taps reshape:
        for dh in (0, 1):             #   (dd, dh, dw, ci)  outer -> inner
            for dw in (0, 1):
                pieces.append(x_pad[:, dd:dd + D, dh:dh + H, dw:dw + W, :])
    patch = jnp.concatenate(pieces, axis=-1)                  # (N,D,H,W,8*C_in)
    patch = patch.reshape(N, D * H * W, 8 * C_in).astype(compute_dtype)
    # TODO(synk): at large spatial extents, fuse this im2col (and the zero pad)
    # back into the kernel with a VMEM scratch + direct per-piece stores to save
    # the extra HBM pass over the (8x-duplicated) patch.

    # ---------------- fused polyphase weight: (8*C_in, 8*C_out) ---------------
    K = jnp.array([[1, 0], [2, 0]], dtype=jnp.int32)            # k-index per (p,d)
    V = jnp.array([[1.0, 0.0], [1.0, 1.0]], dtype=jnp.float32)  # validity mask
    kd = K[:, :, None, None, None, None]
    kh = K[None, None, :, :, None, None]
    kw = K[None, None, None, None, :, :]
    mask = (V[:, :, None, None, None, None]
            * V[None, None, :, :, None, None]
            * V[None, None, None, None, :, :])
    w_khw = jnp.transpose(weight, (2, 3, 4, 0, 1)).astype(jnp.float32)  # (3,3,3,Ci,Co)
    w_taps = w_khw[kd, kh, kw] * mask[..., None, None]   # (pd,dd,ph,dh,pw,dw,Ci,Co)
    w_taps = jnp.transpose(w_taps, (1, 3, 5, 6, 0, 2, 4, 7))  # (dd,dh,dw,Ci,pd,ph,pw,Co)
    w2 = w_taps.reshape(8 * C_in, 8 * C_out).astype(compute_dtype)
    b2 = jnp.tile(bias.astype(jnp.float32), 8).reshape(1, 8 * C_out)

    rows = TD * H * W
    out_sub = pl.pallas_call(
        _deconv_matmul_kernel,
        out_shape=jax.ShapeDtypeStruct((N, D * H * W, 8 * C_out), jnp.float32),
        grid=(N, D // TD),
        in_specs=[
            pl.BlockSpec((1, rows, 8 * C_in), lambda n, m: (n, m, 0)),
            pl.BlockSpec((8 * C_in, 8 * C_out), lambda n, m: (0, 0)),
            pl.BlockSpec((1, 8 * C_out), lambda n, m: (0, 0)),
        ],
        out_specs=pl.BlockSpec((1, rows, 8 * C_out), lambda n, m: (n, m, 0)),
        compiler_params=pltpu.CompilerParams(
            dimension_semantics=("parallel", "parallel"),
            vmem_limit_bytes=32 * 1024 * 1024),
    )(patch, w2, b2)

    # ---------------- sub-pixel (pixel-shuffle) back to NCDHW ------------------
    o = out_sub.reshape(N, D, H, W, 2, 2, 2, C_out)    # (n,d,h,w,pd,ph,pw,co)
    o = jnp.transpose(o, (0, 7, 1, 4, 2, 5, 3, 6))     # (n,co,d,pd,h,ph,w,pw)
    return o.reshape(N, C_out, 2 * D, 2 * H, 2 * W)


def _reference(x_ncdhw, weight, bias):
    """Pure-JAX reference: lhs-dilated conv (== ConvTranspose3d) + bias + ReLU."""
    w_flip = jnp.flip(weight, axis=(2, 3, 4))                  # flip spatial
    w_oidhw = jnp.transpose(w_flip, (1, 0, 2, 3, 4))           # (C_out, C_in, k,k,k)
    out = lax.conv_general_dilated(
        x_ncdhw, w_oidhw,
        window_strides=(1, 1, 1),
        padding=[(1, 2), (1, 2), (1, 2)],
        lhs_dilation=(2, 2, 2),
        dimension_numbers=("NCDHW", "OIDHW", "NCDHW"),
    )
    out = out + bias[None, :, None, None, None]
    return jnp.maximum(out, 0.0)


if __name__ == "__main__":
    key = jax.random.PRNGKey(0)
    k_x, k_w, k_b = jax.random.split(key, 3)

    N, C_in, C_out = 2, 4, 16          # 8*C_out = 128 -> lane-dense output block
    D = H = W = 8

    x = jax.random.normal(k_x, (N, C_in, D, H, W), dtype=jnp.float32)
    # deterministic init mimicking PyTorch uniform(-1/sqrt(fan), 1/sqrt(fan))
    fan = C_out * 3 * 3 * 3
    bound = 1.0 / jnp.sqrt(fan)
    weight = jax.random.uniform(k_w, (C_in, C_out, 3, 3, 3),
                                minval=-bound, maxval=bound, dtype=jnp.float32)
    bias = jax.random.uniform(k_b, (C_out,),
                              minval=-bound, maxval=bound, dtype=jnp.float32)

    deconv = jax.jit(deconv3d_block)
    out = jax.block_until_ready(deconv(x, weight, bias))

    ref = _reference(x, weight, bias)
    assert out.shape == (N, C_out, 2 * D, 2 * H, 2 * W), out.shape
    assert jnp.allclose(out, ref, rtol=1e-4, atol=1e-4), \
        float(jnp.max(jnp.abs(out - ref)))

    print("KERNEL_OK")
</pallas_src>

<mosaic_0001>
module attributes {stable_mosaic.version = 11 : i64} {
  func.func @_deconv_matmul_kernel(%arg0: i32, %arg1: i32, %arg2: memref<1x512x32xf32, #tpu.memory_space<vmem>>, %arg3: memref<32x128xf32, #tpu.memory_space<vmem>>, %arg4: memref<1x128xf32, #tpu.memory_space<vmem>>, %arg5: memref<1x512x128xf32, #tpu.memory_space<vmem>>) attributes {dimension_semantics = [#tpu.dimension_semantics<parallel>, #tpu.dimension_semantics<parallel>], iteration_bounds = array<i64: 2, 1>, scalar_prefetch = 0 : i64, scratch_operands = 0 : i64, tpu.core_type = #tpu.core_type<tc>, window_params = [{transform_indices = @transform_0, window_bounds = array<i64: 1, 512, 32>}, {pipeline_mode = #tpu.pipeline_mode<synchronous>, transform_indices = @transform_1, window_bounds = array<i64: 32, 128>}, {pipeline_mode = #tpu.pipeline_mode<synchronous>, transform_indices = @transform_2, window_bounds = array<i64: 1, 128>}, {transform_indices = @transform_3, window_bounds = array<i64: 1, 512, 128>}]} {
    %c0 = arith.constant 0 : index
    %c0_0 = arith.constant 0 : index
    %c0_1 = arith.constant 0 : index
    %0 = vector.load %arg2[%c0, %c0_0, %c0_1] : memref<1x512x32xf32, #tpu.memory_space<vmem>>, vector<1x512x32xf32>
    %1 = vector.shape_cast %0 : vector<1x512x32xf32> to vector<512x32xf32>
    %c0_2 = arith.constant 0 : index
    %c0_3 = arith.constant 0 : index
    %2 = vector.load %arg3[%c0_2, %c0_3] : memref<32x128xf32, #tpu.memory_space<vmem>>, vector<32x128xf32>
    %cst = arith.constant dense<0.000000e+00> : vector<512x128xf32>
    %3 = tpu.matmul %1, %2, %cst {dimension_numbers = #tpu.dot_dimension_numbers<[1], [0], [0], [1], [0, 0, 1, 1], [], []>} : vector<512x32xf32>, vector<32x128xf32>, vector<512x128xf32> -> vector<512x128xf32>
    %c0_4 = arith.constant 0 : index
    %c0_5 = arith.constant 0 : index
    %4 = vector.load %arg4[%c0_4, %c0_5] : memref<1x128xf32, #tpu.memory_space<vmem>>, vector<1x128xf32>
    %5 = vector.broadcast %4 : vector<1x128xf32> to vector<512x128xf32>
    %6 = arith.addf %3, %5 : vector<512x128xf32>
    %cst_6 = arith.constant 0.000000e+00 : f32
    %7 = vector.broadcast %cst_6 : f32 to vector<512x128xf32>
    %8 = arith.maximumf %6, %7 : vector<512x128xf32>
    %c0_7 = arith.constant 0 : index
    %c0_8 = arith.constant 0 : index
    %c0_9 = arith.constant 0 : index
    %9 = vector.load %arg5[%c0_7, %c0_8, %c0_9] : memref<1x512x128xf32, #tpu.memory_space<vmem>>, vector<1x512x128xf32>
    %10 = vector.shape_cast %9 : vector<1x512x128xf32> to vector<512x128xf32>
    %11 = vector.shape_cast %8 : vector<512x128xf32> to vector<1x512x128xf32>
    tpu.vector_store %arg5[%c0_7, %c0_8, %c0_9], %11 {strides = array<i32>} : memref<1x512x128xf32, #tpu.memory_space<vmem>>, vector<1x512x128xf32>,
    return
  }
  func.func @transform_0(%arg0: i32, %arg1: i32) -> (i32, i32, i32) {
    %c0_i32 = arith.constant 0 : i32
    %c0_i32_0 = arith.constant 0 : i32
    return %arg0, %arg1, %c0_i32 : i32, i32, i32
  }
  func.func @transform_1(%arg0: i32, %arg1: i32) -> (i32, i32) {
    %c0_i32 = arith.constant 0 : i32
    %c0_i32_0 = arith.constant 0 : i32
    %c0_i32_1 = arith.constant 0 : i32
    return %c0_i32, %c0_i32_0 : i32, i32
  }
  func.func @transform_2(%arg0: i32, %arg1: i32) -> (i32, i32) {
    %c0_i32 = arith.constant 0 : i32
    %c0_i32_0 = arith.constant 0 : i32
    %c0_i32_1 = arith.constant 0 : i32
    return %c0_i32, %c0_i32_0 : i32, i32
  }
  func.func @transform_3(%arg0: i32, %arg1: i32) -> (i32, i32, i32) {
    %c0_i32 = arith.constant 0 : i32
    %c0_i32_0 = arith.constant 0 : i32
    return %arg0, %arg1, %c0_i32 : i32, i32, i32
  }
}

</mosaic_0001>

<llo_original>
// kernel: tile.8
$region0: #{tile.8}
  #allocation2 [shape = 's32[1]{0}', space=sflag, size = 0x4, scoped, tag = 'scoped memory for tile.8']
  %s0 = inlined_call_operand.hbm [shape: f32[16], index: 0, kind: input, shape index: {}]
  %s1 = inlined_call_operand.vmem [shape: f32[8,16], index: 1, kind: output, shape index: {}]
  $region1: #{tile.8} parent=0
    #allocation0 [shape = 'u8[512]{0}', space=vmem, size = 0x400, scoped, tag = 'operand span for operand 0']
    #allocation1 [shape = 's32[1]{0}', space=sflag, size = 0x4, scoped, tag = 'scoped memory for tile.8']
    %2 = vsyncpa [#allocation1], 0
    // Predicated region
    $region2: #{tile.8} parent=1 // pred_check
      _
    $region3: #{tile.8} parent=1 // pred_check_branch
      %4 = sbr.rel (0) target = $region5
    $region4: #{tile.8} parent=1 // pred_region
      %s6 = ssub.s32 16, 16
      %7 = vsyncadd [#allocation1], %s6
      %s9 = sshll.u32 [#allocation0], 4
      %s10 = int_to_ptr.vmem [resolvable:$true] %s9
      %12 = dma.hbm_to_vmem [thread:$0]  %s0, 16, %s10, [#allocation1]
    $region5: #{tile.8} parent=1 // pred_fallthru
      _
    // Predicated region
    $region6: #{tile.8} parent=1 // pred_check
      _
    $region7: #{tile.8} parent=1 // pred_check_branch
      %14 = sbr.rel (0) target = $region9
    $region8: #{tile.8} parent=1 // pred_region
      %15 = dma.done [#allocation1], 16
    $region9: #{tile.8} parent=1 // pred_fallthru
      _
    %v16 = vld [vmem:[#allocation0] ss:$0 sm:$0xff]
    %17 = vst [vmem:[%s1] sm:$0xff] %v16
    %18 = vsyncpa [#allocation1], 1

// kernel: tile.9
$region0: #{tile.9}
  %s0 = inlined_call_operand.vmem [shape: f32[8,16], index: 0, kind: input, shape index: {}]
  %s1 = inlined_call_operand.vmem [shape: f32[1,128], index: 1, kind: output, shape index: {}]
  $region1: #{tile.9} parent=0
    #allocation0 [shape = 'u8[4096]{0}', space=vmem, size = 0x1000, scoped, tag = 'scoped mem for output reshape']
    %v2 = vld [vmem:[%s0] sm:$0x1]
    %vm3 = vcmask 130048
    %4 = vst.msk [vmem:[#allocation0] sm:$0x1] %vm3, %v2
    %s5 = scalar_lea.vmem %s0, 7
    %v6 = vld [vmem:[%s5] sm:$0x1]
    %7 = vrot.lane.b32.xlu0 %v6, 112
    %v8 = vpop.permute.xlu0 %7
    %vm9 = vcmask 1048448
    %10 = vst.msk [vmem:[#allocation0] sm:$0x1] %vm9, %v8
    %s11 = scalar_lea.vmem %s0, 6
    %v12 = vld [vmem:[%s11] sm:$0x1]
    %13 = vrot.lane.b32.xlu0 %v12, 96
    %v14 = vpop.permute.xlu0 %13
    %vm15 = vcmask 917248
    %16 = vst.msk [vmem:[#allocation0] sm:$0x1] %vm15, %v14
    %s17 = scalar_lea.vmem %s0, 5
    %v18 = vld [vmem:[%s17] sm:$0x1]
    %19 = vrot.lane.b32.xlu0 %v18, 80
    %v20 = vpop.permute.xlu0 %19
    %vm21 = vcmask 786048
    %22 = vst.msk [vmem:[#allocation0] sm:$0x1] %vm21, %v20
    %s23 = scalar_lea.vmem %s0, 4
    %v24 = vld [vmem:[%s23] sm:$0x1]
    %25 = vrot.lane.b32.xlu0 %v24, 64
    %v26 = vpop.permute.xlu0 %25
    %vm27 = vcmask 654848
    %28 = vst.msk [vmem:[#allocation0] sm:$0x1] %vm27, %v26
    %s29 = scalar_lea.vmem %s0, 3
    %v30 = vld [vmem:[%s29] sm:$0x1]
    %31 = vrot.lane.b32.xlu0 %v30, 48
    %v32 = vpop.permute.xlu0 %31
    %vm33 = vcmask 523648
    %34 = vst.msk [vmem:[#allocation0] sm:$0x1] %vm33, %v32
    %s35 = scalar_lea.vmem %s0, 2
    %v36 = vld [vmem:[%s35] sm:$0x1]
    %37 = vrot.lane.b32.xlu0 %v36, 32
    %v38 = vpop.permute.xlu0 %37
    %vm39 = vcmask 392448
    %40 = vst.msk [vmem:[#allocation0] sm:$0x1] %vm39, %v38
    %s41 = scalar_lea.vmem %s0, 1
    %v42 = vld [vmem:[%s41] sm:$0x1]
    %43 = vrot.lane.b32.xlu0 %v42, 16
    %v44 = vpop.permute.xlu0 %43
    %vm45 = vcmask 261248
    %46 = vst.msk [vmem:[#allocation0] sm:$0x1] %vm45, %v44
    %s48 = sshllo.u32 0, 1
    %v50 = vld [vmem:[#allocation0] sm:%s48]
    %s51 = sshllo.u32 0, 1
    %52 = vst [vmem:[%s1] sm:%s51] %v50

// kernel: deconv3d_block.1
$region0: #{deconv3d_block.1}
  #allocation0 [shape = 'u32[]', space=smem, size = 0x4, offset = 0x4, fixed_abs, tag = 'smem constant byte address 0x4 - core index']
  #allocation1 [shape = 'u32[144,128]{1,0:T(1,128)}', space=vmem, size = 0x12000, scoped, tag = 'internal scratch']
  %s0 = inlined_call_operand.vmem [shape: f32[2,512,32], index: 0, kind: input, shape index: {}]
  %s1 = inlined_call_operand.vmem [shape: f32[32,128], index: 1, kind: input, shape index: {}]
  %s2 = inlined_call_operand.vmem [shape: f32[1,128], index: 2, kind: input, shape index: {}]
  %s3 = inlined_call_operand.vmem [shape: f32[2,512,128], index: 3, kind: output, shape index: {}]
  %s4 = sld [smem:[#allocation0]]
  $region45: #{deconv3d_block.1} parent=0
    _
  %s6 = ssub.s32 1, %s4
  %s7 = scalar_select 0, %s6, %s4
  loop: start=0, step=1, limit=4
  $region2: #{deconv3d_block.1} parent=0 // loop_pre_header
    _
  $region3: #{deconv3d_block.1} parent=0 // loop_header
    %s9 = sphi 0, %s13
    %p10 = scmp.ge.s32.totalorder %s9, 4
    %s16 = sphi 0, %s28
    %s17 = sphi 0, %s24
    %s18 = sphi 0, %s16
    %s19 = sphi 0, %s17
    %s20 = sphi 0, %s18
    %s21 = sphi 0, %s19
    %s33 = sphi 0, %s35
    %s36 = sphi 0, %s33
    %s37 = sphi 0, %s36
    %s53 = sphi 0, %s37
    %s57 = sphi 0, %s57
    %s59 = sphi 0, %s57
    %s60 = sphi 0, %s59
    %s74 = sphi 0, %s60
    %s78 = sphi 0, %s78
    %s80 = sphi 0, %s78
    %s81 = sphi 0, %s80
    %s95 = sphi 0, %s81
    %s103 = sphi 0, %s105
    %s106 = sphi 0, %s103
    %s107 = sphi 0, %s106
    %s123 = sphi 0, %s107
  $region4: #{deconv3d_block.1} parent=0 // loop_header_branch
    %12 = sbr.rel (%p10) target = $region8
  $region5: #{deconv3d_block.1} parent=0 // loop_body
    %s14 = ssub.s32 %s9, 1
    %s15 = ssub.s32 %s9, 2
    %s22 = sadd.s32 1, %s17
    %p23 = scmp.ge.s32.totalorder %s22, 1
    %s24 = scalar_select %p23, 0, %s22
    %s25 = sadd.s32 1, %s16
    %s26 = scalar_select %p23, %s25, %s16
    %p27 = scmp.ge.s32.totalorder %s26, 2
    %s28 = scalar_select %p27, 0, %s26
    %s29 = ssub.s32 %s16, %s28
    %s30 = ssub.s32 %s17, %s24
    %s31 = sor.u32 %s29, %s30
    %p32 = scmp.eq.s32.totalorder %s31, 0
    %s34 = sadd.s32 %s33, 1
    %s35 = scalar_select %p32, %s33, %s34
    %p38 = pneg %p32
    %p39 = scmp.eq.s32.totalorder %s9, 1
    %p40 = por %p38, %p39
    %p41 = scmp.ne.s32.totalorder %s33, %s36
    %p42 = scmp.eq.s32.totalorder %s9, 0
    %p43 = por %p41, %p42
    %p44 = scmp.ne.s32.totalorder %s33, %s36
    %p45 = scmp.eq.s32.totalorder %s14, 1
    %p46 = por %p44, %p45
    %p47 = scmp.ne.s32.totalorder %s36, %s37
    %p48 = scmp.eq.s32.totalorder %s14, 0
    %p49 = por %p47, %p48
    %p50 = scmp.ne.s32.totalorder %s36, %s37
    %p51 = scmp.eq.s32.totalorder %s15, 1
    %p52 = por %p50, %p51
    %p54 = scmp.ne.s32.totalorder %s37, %s53
    %p55 = scmp.eq.s32.totalorder %s15, 0
    %p56 = por %p54, %p55
    %s58 = sadd.s32 %s57, 1
    %p61 = scmp.eq.s32.totalorder %s9, 1
    %p62 = scmp.ne.s32.totalorder %s57, %s59
    %p63 = scmp.eq.s32.totalorder %s9, 0
    %p64 = por %p62, %p63
    %p65 = scmp.ne.s32.totalorder %s57, %s59
    %p66 = scmp.eq.s32.totalorder %s14, 1
    %p67 = por %p65, %p66
    %p68 = scmp.ne.s32.totalorder %s59, %s60
    %p69 = scmp.eq.s32.totalorder %s14, 0
    %p70 = por %p68, %p69
    %p71 = scmp.ne.s32.totalorder %s59, %s60
    %p72 = scmp.eq.s32.totalorder %s15, 1
    %p73 = por %p71, %p72
    %p75 = scmp.ne.s32.totalorder %s60, %s74
    %p76 = scmp.eq.s32.totalorder %s15, 0
    %p77 = por %p75, %p76
    %s79 = sadd.s32 %s78, 1
    %p82 = scmp.eq.s32.totalorder %s9, 1
    %p83 = scmp.ne.s32.totalorder %s78, %s80
    %p84 = scmp.eq.s32.totalorder %s9, 0
    %p85 = por %p83, %p84
    %p86 = scmp.ne.s32.totalorder %s78, %s80
    %p87 = scmp.eq.s32.totalorder %s14, 1
    %p88 = por %p86, %p87
    %p89 = scmp.ne.s32.totalorder %s80, %s81
    %p90 = scmp.eq.s32.totalorder %s14, 0
    %p91 = por %p89, %p90
    %p92 = scmp.ne.s32.totalorder %s80, %s81
    %p93 = scmp.eq.s32.totalorder %s15, 1
    %p94 = por %p92, %p93
    %p96 = scmp.ne.s32.totalorder %s81, %s95
    %p97 = scmp.eq.s32.totalorder %s15, 0
    %p98 = por %p96, %p97
    %s99 = ssub.s32 %s16, %s28
    %s100 = ssub.s32 %s17, %s24
    %s101 = sor.u32 %s99, %s100
    %p102 = scmp.eq.s32.totalorder %s101, 0
    %s104 = sadd.s32 %s103, 1
    %s105 = scalar_select %p102, %s103, %s104
    %p108 = pneg %p102
    %p109 = scmp.eq.s32.totalorder %s9, 1
    %p110 = por %p108, %p109
    %p111 = scmp.ne.s32.totalorder %s103, %s106
    %p112 = scmp.eq.s32.totalorder %s9, 0
    %p113 = por %p111, %p112
    %p114 = scmp.ne.s32.totalorder %s103, %s106
    %p115 = scmp.eq.s32.totalorder %s14, 1
    %p116 = por %p114, %p115
    %p117 = scmp.ne.s32.totalorder %s106, %s107
    %p118 = scmp.eq.s32.totalorder %s14, 0
    %p119 = por %p117, %p118
    %p120 = scmp.ne.s32.totalorder %s106, %s107
    %p121 = scmp.eq.s32.totalorder %s15, 1
    %p122 = por %p120, %p121
    %p124 = scmp.ne.s32.totalorder %s107, %s123
    %p125 = scmp.eq.s32.totalorder %s15, 0
    %p126 = por %p124, %p125
    %p127 = scmp.le.s32.totalorder 1, %s9
    %p128 = scmp.lt.s32.totalorder %s9, 3
    %p129 = pnand %p127, %p128
    %p130 = pneg %p129
    // Predicated region
    $region9: #{deconv3d_block.1} parent=5 // pred_check
      _
    $region10: #{deconv3d_block.1} parent=5 // pred_check_branch
      %132 = sbr.rel (%p129) target = $region12
    $region11: #{deconv3d_block.1} parent=5 // pred_region
      %s133 = ssub.s32 %s9, 1
      // Predicated region
      $region13: #{deconv3d_block.1} parent=11 // pred_check
        %p134 = pneg %p70
      $region14: #{deconv3d_block.1} parent=11 // pred_check_branch
        %136 = sbr.rel (%p134) target = $region16
      $region15: #{deconv3d_block.1} parent=11 // pred_region
        _
      $region16: #{deconv3d_block.1} parent=11 // pred_fallthru
        _
      // Predicated region
      $region17: #{deconv3d_block.1} parent=11 // pred_check
        %p137 = pneg %p91
      $region18: #{deconv3d_block.1} parent=11 // pred_check_branch
        %139 = sbr.rel (%p137) target = $region20
      $region19: #{deconv3d_block.1} parent=11 // pred_region
        _
      $region20: #{deconv3d_block.1} parent=11 // pred_fallthru
        _
    $region12: #{deconv3d_block.1} parent=5 // pred_fallthru
      _
    %p140 = scmp.lt.s32.totalorder %s9, 2
    // Predicated region
    $region21: #{deconv3d_block.1} parent=5 // pred_check
      %p141 = pneg %p140
    $region22: #{deconv3d_block.1} parent=5 // pred_check_branch
      %143 = sbr.rel (%p141) target = $region24
    $region23: #{deconv3d_block.1} parent=5 // pred_region
      // Predicated region
      $region25: #{deconv3d_block.1} parent=23 // pred_check
        %p144 = pneg %p43
      $region26: #{deconv3d_block.1} parent=23 // pred_check_branch
        %146 = sbr.rel (%p144) target = $region28
      $region27: #{deconv3d_block.1} parent=23 // pred_region
        %s147 = smul.u32 64, %s17
        %p148 = scmp.lt.s32.totalorder %s16, 1
        %s149 = scalar_select %p148, %s16, 1
        %p150 = scmp.lt.s32.totalorder %s147, 63
        %s151 = scalar_select %p150, %s147, 63
        %s152 = smul.addr %s149, 64
        %s153 = sadd.s32 %s151, %s152
        %s154 = smul.addr %s153, 8
        %s155 = scalar_lea.vmem %s0, %s154
        %s156 = smul.u32 64, %s17
      $region28: #{deconv3d_block.1} parent=23 // pred_fallthru
        _
    $region24: #{deconv3d_block.1} parent=5 // pred_fallthru
      _
    %p157 = scmp.le.s32.totalorder 1, %s9
    %p158 = scmp.lt.s32.totalorder %s9, 3
    %p159 = pnand %p157, %p158
    %p160 = pneg %p159
    // Predicated region
    $region29: #{deconv3d_block.1} parent=5 // pred_check
      _
    $region30: #{deconv3d_block.1} parent=5 // pred_check_branch
      %162 = sbr.rel (%p159) target = $region32
    $region31: #{deconv3d_block.1} parent=5 // pred_region
      %s163 = ssub.s32 %s9, 1
      %s164 = smul.u32 64, %s19
      %p165 = scmp.lt.s32.totalorder %s18, 1
      %s166 = scalar_select %p165, %s18, 1
      %p167 = scmp.lt.s32.totalorder %s164, 63
      %s168 = scalar_select %p167, %s164, 63
      %s169 = smul.addr %s166, 64
      %s170 = sadd.s32 %s168, %s169
      %s171 = smul.addr %s170, 8
      %s172 = scalar_lea.vmem %s0, %s171
      %p173 = pneg %p49
      %p174 = pneg %p46
      %p175 = pneg %p70
      %p176 = pneg %p67
      %p177 = pneg %p91
      %p178 = pneg %p88
      %p179 = pneg %p119
      %p180 = pneg %p116
      %s181 = smul.u32 64, %s19
      %p182 = scmp.lt.s32.totalorder %s18, 1
      %s183 = scalar_select %p182, %s18, 1
      %p184 = scmp.lt.s32.totalorder %s181, 63
      %s185 = scalar_select %p184, %s181, 63
      %s186 = smul.addr %s183, 64
      %s187 = sadd.s32 %s185, %s186
      %s188 = smul.addr %s187, 8
      %s189 = scalar_lea.vmem %s3, %s188
      %s190 = smul.u32 64, %s19
      %p191 = scmp.lt.s32.totalorder %s18, 1
      %s192 = scalar_select %p191, %s18, 1
      %p193 = scmp.lt.s32.totalorder %s190, 63
      %s194 = scalar_select %p193, %s190, 63
      %s195 = smul.addr %s192, 64
      %s196 = sadd.s32 %s194, %s195
      %s197 = smul.addr %s196, 8
      %s198 = scalar_lea.vmem %s0, %s197
      %s199 = smul.u32 64, %s19
      %s200 = smul.u32 64, %s19
      %p201 = scmp.lt.s32.totalorder %s18, 1
      %s202 = scalar_select %p201, %s18, 1
      %p203 = scmp.lt.s32.totalorder %s200, 63
      %s204 = scalar_select %p203, %s200, 63
      %s205 = smul.addr %s202, 64
      %s206 = sadd.s32 %s204, %s205
      %s207 = smul.addr %s206, 8
      %s208 = scalar_lea.vmem %s3, %s207
      %s209 = smul.u32 64, %s19
      %v210 = vld [vmem:[%s198] sm:$0xff]
      %v211 = vld [vmem:[%s198 + $0x8] sm:$0xff]
      %v212 = vld [vmem:[%s198 + $0x10] sm:$0xff]
      %v213 = vld [vmem:[%s198 + $0x18] sm:$0xff]
      %v214 = vld [vmem:[%s198 + $0x20] sm:$0xff]
      %v215 = vld [vmem:[%s198 + $0x28] sm:$0xff]
      %v216 = vld [vmem:[%s198 + $0x30] sm:$0xff]
      %v217 = vld [vmem:[%s198 + $0x38] sm:$0xff]
      %v218 = vld [vmem:[%s198 + $0x40] sm:$0xff]
      %v219 = vld [vmem:[%s198 + $0x48] sm:$0xff]
      %v220 = vld [vmem:[%s198 + $0x50] sm:$0xff]
      %v221 = vld [vmem:[%s198 + $0x58] sm:$0xff]
      %v222 = vld [vmem:[%s198 + $0x60] sm:$0xff]
      %v223 = vld [vmem:[%s198 + $0x68] sm:$0xff]
      %v224 = vld [vmem:[%s198 + $0x70] sm:$0xff]
      %v225 = vld [vmem:[%s198 + $0x78] sm:$0xff]
      %v226 = vld [vmem:[%s198 + $0x80] sm:$0xff]
      %v227 = vld [vmem:[%s198 + $0x88] sm:$0xff]
      %v228 = vld [vmem:[%s198 + $0x90] sm:$0xff]
      %v229 = vld [vmem:[%s198 + $0x98] sm:$0xff]
      %v230 = vld [vmem:[%s198 + $0xa0] sm:$0xff]
      %v231 = vld [vmem:[%s198 + $0xa8] sm:$0xff]
      %v232 = vld [vmem:[%s198 + $0xb0] sm:$0xff]
      %v233 = vld [vmem:[%s198 + $0xb8] sm:$0xff]
      %v234 = vld [vmem:[%s198 + $0xc0] sm:$0xff]
      %v235 = vld [vmem:[%s198 + $0xc8] sm:$0xff]
      %v236 = vld [vmem:[%s198 + $0xd0] sm:$0xff]
      %v237 = vld [vmem:[%s198 + $0xd8] sm:$0xff]
      %v238 = vld [vmem:[%s198 + $0xe0] sm:$0xff]
      %v239 = vld [vmem:[%s198 + $0xe8] sm:$0xff]
      %v240 = vld [vmem:[%s198 + $0xf0] sm:$0xff]
      %v241 = vld [vmem:[%s198 + $0xf8] sm:$0xff]
      %v242 = vld [vmem:[%s198 + $0x100] sm:$0xff]
      %v243 = vld [vmem:[%s198 + $0x108] sm:$0xff]
      %v244 = vld [vmem:[%s198 + $0x110] sm:$0xff]
      %v245 = vld [vmem:[%s198 + $0x118] sm:$0xff]
      %v246 = vld [vmem:[%s198 + $0x120] sm:$0xff]
      %v247 = vld [vmem:[%s198 + $0x128] sm:$0xff]
      %v248 = vld [vmem:[%s198 + $0x130] sm:$0xff]
      %v249 = vld [vmem:[%s198 + $0x138] sm:$0xff]
      %v250 = vld [vmem:[%s198 + $0x140] sm:$0xff]
      %v251 = vld [vmem:[%s198 + $0x148] sm:$0xff]
      %v252 = vld [vmem:[%s198 + $0x150] sm:$0xff]
      %v253 = vld [vmem:[%s198 + $0x158] sm:$0xff]
      %v254 = vld [vmem:[%s198 + $0x160] sm:$0xff]
      %v255 = vld [vmem:[%s198 + $0x168] sm:$0xff]
      %v256 = vld [vmem:[%s198 + $0x170] sm:$0xff]
      %v257 = vld [vmem:[%s198 + $0x178] sm:$0xff]
      %v258 = vld [vmem:[%s198 + $0x180] sm:$0xff]
      %v259 = vld [vmem:[%s198 + $0x188] sm:$0xff]
      %v260 = vld [vmem:[%s198 + $0x190] sm:$0xff]
      %v261 = vld [vmem:[%s198 + $0x198] sm:$0xff]
      %v262 = vld [vmem:[%s198 + $0x1a0] sm:$0xff]
      %v263 = vld [vmem:[%s198 + $0x1a8] sm:$0xff]
      %v264 = vld [vmem:[%s198 + $0x1b0] sm:$0xff]
      %v265 = vld [vmem:[%s198 + $0x1b8] sm:$0xff]
      %v266 = vld [vmem:[%s198 + $0x1c0] sm:$0xff]
      %v267 = vld [vmem:[%s198 + $0x1c8] sm:$0xff]
      %v268 = vld [vmem:[%s198 + $0x1d0] sm:$0xff]
      %v269 = vld [vmem:[%s198 + $0x1d8] sm:$0xff]
      %v270 = vld [vmem:[%s198 + $0x1e0] sm:$0xff]
      %v271 = vld [vmem:[%s198 + $0x1e8] sm:$0xff]
      %v272 = vld [vmem:[%s198 + $0x1f0] sm:$0xff]
      %v273 = vld [vmem:[%s198 + $0x1f8] sm:$0xff]
      %v274 = vld [vmem:[%s1] sm:$0xff]
      %v275 = vld [vmem:[%s1 + $0x8] sm:$0xff]
      %v276 = vld [vmem:[%s1 + $0x10] sm:$0xff]
      %v277 = vld [vmem:[%s1 + $0x18] sm:$0xff]
      %v278 = vld [vmem:[%s2] sm:$0x1]
      %v280 = vlaneseq
      %v281 = vshrl.u32 %v280, 7
      %v282 = vsub.s32 0, %v281
      %v283 = vrot.slane %v278, %v282
      %vm285 = vcmask 261120
      %v287 = vsel %vm285, %v210, 0
      %v290 = vsel %vm285, %v211, 0
      %v293 = vsel %vm285, %v212, 0
      %v296 = vsel %vm285, %v213, 0
      %v299 = vsel %vm285, %v214, 0
      %v302 = vsel %vm285, %v215, 0
      %v305 = vsel %vm285, %v216, 0
      %v308 = vsel %vm285, %v217, 0
      %v311 = vsel %vm285, %v218, 0
      %v314 = vsel %vm285, %v219, 0
      %v317 = vsel %vm285, %v220, 0
      %v320 = vsel %vm285, %v221, 0
      %v323 = vsel %vm285, %v222, 0
      %v326 = vsel %vm285, %v223, 0
      %v329 = vsel %vm285, %v224, 0
      %v332 = vsel %vm285, %v225, 0
      %v335 = vsel %vm285, %v226, 0
      %v338 = vsel %vm285, %v227, 0
      %v341 = vsel %vm285, %v228, 0
      %v344 = vsel %vm285, %v229, 0
      %v347 = vsel %vm285, %v230, 0
      %v350 = vsel %vm285, %v231, 0
      %v353 = vsel %vm285, %v232, 0
      %v356 = vsel %vm285, %v233, 0
      %v359 = vsel %vm285, %v234, 0
      %v362 = vsel %vm285, %v235, 0
      %v365 = vsel %vm285, %v236, 0
      %v368 = vsel %vm285, %v237, 0
      %v371 = vsel %vm285, %v238, 0
      %v374 = vsel %vm285, %v239, 0
      %v377 = vsel %vm285, %v240, 0
      %v380 = vsel %vm285, %v241, 0
      %v383 = vsel %vm285, %v242, 0
      %v386 = vsel %vm285, %v243, 0
      %v389 = vsel %vm285, %v244, 0
      %v392 = vsel %vm285, %v245, 0
      %v395 = vsel %vm285, %v246, 0
      %v398 = vsel %vm285, %v247, 0
      %v401 = vsel %vm285, %v248, 0
      %v404 = vsel %vm285, %v249, 0
      %v407 = vsel %vm285, %v250, 0
      %v410 = vsel %vm285, %v251, 0
      %v413 = vsel %vm285, %v252, 0
      %v416 = vsel %vm285, %v253, 0
      %v419 = vsel %vm285, %v254, 0
      %v422 = vsel %vm285, %v255, 0
      %v425 = vsel %vm285, %v256, 0
      %v428 = vsel %vm285, %v257, 0
      %v431 = vsel %vm285, %v258, 0
      %v434 = vsel %vm285, %v259, 0
      %v437 = vsel %vm285, %v260, 0
      %v440 = vsel %vm285, %v261, 0
      %v443 = vsel %vm285, %v262, 0
      %v446 = vsel %vm285, %v263, 0
      %v449 = vsel %vm285, %v264, 0
      %v452 = vsel %vm285, %v265, 0
      %v455 = vsel %vm285, %v266, 0
      %v458 = vsel %vm285, %v267, 0
      %v461 = vsel %vm285, %v268, 0
      %v464 = vsel %vm285, %v269, 0
      %v467 = vsel %vm285, %v270, 0
      %v470 = vsel %vm285, %v271, 0
      %v473 = vsel %vm285, %v272, 0
      %v476 = vsel %vm285, %v273, 0
      %478 = vmatprep.subr.mxu0 0.0
      %479 = vmatpush1.msra.mxu0 %v274
      %480 = vmatprep.subr.mxu0 0.0
      %481 = vmatpush1.msra.mxu0 %v275
      %482 = vmatprep.subr.mxu0 0.0
      %483 = vmatpush1.msra.mxu0 %v276
      %484 = vmatprep.subr.mxu0 0.0
      %485 = vmatpush1.msra.mxu0 %v277
      %486 = vmatprep.subr.mxu0 0.0
      %487 = vmatpush1.msra.mxu0 0.0
      %488 = vmatprep.subr.mxu0 0.0
      %489 = vmatpush1.msra.mxu0 0.0
      %490 = vmatprep.subr.mxu0 0.0
      %491 = vmatpush1.msra.mxu0 0.0
      %492 = vmatprep.subr.mxu0 0.0
      %493 = vmatpush1.msra.mxu0 0.0
      %494 = vmatprep.subr.mxu0 0.0
      %495 = vmatpush1.msra.mxu0 0.0
      %496 = vmatprep.subr.mxu0 0.0
      %497 = vmatpush1.msra.mxu0 0.0
      %498 = vmatprep.subr.mxu0 0.0
      %499 = vmatpush1.msra.mxu0 0.0
      %500 = vmatprep.subr.mxu0 0.0
      %501 = vmatpush1.msra.mxu0 0.0
      %502 = vmatprep.subr.mxu0 0.0
      %503 = vmatpush1.msra.mxu0 0.0
      %504 = vmatprep.subr.mxu0 0.0
      %505 = vmatpush1.msra.mxu0 0.0
      %506 = vmatprep.subr.mxu0 0.0
      %507 = vmatpush1.msra.mxu0 0.0
      %508 = vmatprep.subr.mxu0 0.0
      %509 = vmatpush1.msra.mxu0 0.0
      %510 = vmatprep.subr.mxu0 0.0
      %511 = vmatpush1.msra.mxu0 0.0
      %512 = vmatprep.subr.mxu0 0.0
      %513 = vmatpush1.msra.mxu0 0.0
      %514 = vmatprep.subr.mxu0 0.0
      %515 = vmatpush1.msra.mxu0 0.0
      %516 = vmatprep.subr.mxu0 0.0
      %517 = vmatpush1.msra.mxu0 0.0
      %518 = vmatprep.subr.mxu0 0.0
      %519 = vmatpush1.msra.mxu0 0.0
      %520 = vmatprep.subr.mxu0 0.0
      %521 = vmatpush1.msra.mxu0 0.0
      %522 = vmatprep.subr.mxu0 0.0
      %523 = vmatpush1.msra.mxu0 0.0
      %524 = vmatprep.subr.mxu0 0.0
      %525 = vmatpush1.msra.mxu0 0.0
      %526 = vmatprep.subr.mxu0 0.0
      %527 = vmatpush1.msra.mxu0 0.0
      %528 = vmatprep.subr.mxu0 0.0
      %529 = vmatpush1.msra.mxu0 0.0
      %530 = vmatprep.subr.mxu0 0.0
      %531 = vmatpush1.msra.mxu0 0.0
      %532 = vmatprep.subr.mxu0 0.0
      %533 = vmatpush1.msra.mxu0 0.0
      %534 = vmatprep.subr.mxu0 0.0
      %535 = vmatpush1.msra.mxu0 0.0
      %536 = vmatprep.subr.mxu0 0.0
      %537 = vmatpush1.msra.mxu0 0.0
      %538 = vmatprep.subr.mxu0 0.0
      %539 = vmatpush1.msra.mxu0 0.0
      %540 = vmatprep.subr.mxu0 0.0
      %541 = vmatpush1.msra.mxu0 0.0
      %542 = vmatprep.mubr.f32.mxu0 0.0
      %543 = vmatmul.mubr.f32.gmra.mrb[0].mxu0 %v287
      %v544 = vpop.f32.mrb[0].mxu0
      %v545 = vadd.f32 %v283, %v544
      %v546 = vpop.f32.mrb[0].mxu0
      %547 = vmatprep.mubr.f32.mxu0 0.0
      %548 = vmatmul.mubr.f32.gmra.mrb[0].mxu0 %v290
      %v549 = vpop.f32.mrb[0].mxu0
      %v550 = vadd.f32 %v283, %v549
      %v551 = vpop.f32.mrb[0].mxu0
      %552 = vmatprep.mubr.f32.mxu0 0.0
      %553 = vmatmul.mubr.f32.gmra.mrb[0].mxu0 %v293
      %v554 = vpop.f32.mrb[0].mxu0
      %v555 = vadd.f32 %v283, %v554
      %v556 = vpop.f32.mrb[0].mxu0
      %557 = vmatprep.mubr.f32.mxu0 0.0
      %558 = vmatmul.mubr.f32.gmra.mrb[0].mxu0 %v296
      %v559 = vpop.f32.mrb[0].mxu0
      %v560 = vadd.f32 %v283, %v559
      %v561 = vpop.f32.mrb[0].mxu0
      %562 = vmatprep.mubr.f32.mxu0 0.0
      %563 = vmatmul.mubr.f32.gmra.mrb[0].mxu0 %v299
      %v564 = vpop.f32.mrb[0].mxu0
      %v565 = vadd.f32 %v283, %v564
      %v566 = vpop.f32.mrb[0].mxu0
      %567 = vmatprep.mubr.f32.mxu0 0.0
      %568 = vmatmul.mubr.f32.gmra.mrb[0].mxu0 %v302
      %v569 = vpop.f32.mrb[0].mxu0
      %v570 = vadd.f32 %v283, %v569
      %v571 = vpop.f32.mrb[0].mxu0
      %572 = vmatprep.mubr.f32.mxu0 0.0
      %573 = vmatmul.mubr.f32.gmra.mrb[0].mxu0 %v305
      %v574 = vpop.f32.mrb[0].mxu0
      %v575 = vadd.f32 %v283, %v574
      %v576 = vpop.f32.mrb[0].mxu0
      %577 = vmatprep.mubr.f32.mxu0 0.0
      %578 = vmatmul.mubr.f32.gmra.mrb[0].mxu0 %v308
      %v579 = vpop.f32.mrb[0].mxu0
      %v580 = vadd.f32 %v283, %v579
      %v581 = vpop.f32.mrb[0].mxu0
      %582 = vmatprep.mubr.f32.mxu0 0.0
      %583 = vmatmul.mubr.f32.gmra.mrb[0].mxu0 %v311
      %v584 = vpop.f32.mrb[0].mxu0
      %v585 = vadd.f32 %v283, %v584
      %v586 = vpop.f32.mrb[0].mxu0
      %587 = vmatprep.mubr.f32.mxu0 0.0
      %588 = vmatmul.mubr.f32.gmra.mrb[0].mxu0 %v314
      %v589 = vpop.f32.mrb[0].mxu0
      %v590 = vadd.f32 %v283, %v589
      %v591 = vpop.f32.mrb[0].mxu0
      %592 = vmatprep.mubr.f32.mxu0 0.0
      %593 = vmatmul.mubr.f32.gmra.mrb[0].mxu0 %v317
      %v594 = vpop.f32.mrb[0].mxu0
      %v595 = vadd.f32 %v283, %v594
      %v596 = vpop.f32.mrb[0].mxu0
      %597 = vmatprep.mubr.f32.mxu0 0.0
      %598 = vmatmul.mubr.f32.gmra.mrb[0].mxu0 %v320
      %v599 = vpop.f32.mrb[0].mxu0
      %v600 = vadd.f32 %v283, %v599
      %v601 = vpop.f32.mrb[0].mxu0
      %602 = vmatprep.mubr.f32.mxu0 0.0
      %603 = vmatmul.mubr.f32.gmra.mrb[0].mxu0 %v323
      %v604 = vpop.f32.mrb[0].mxu0
      %v605 = vadd.f32 %v283, %v604
      %v606 = vpop.f32.mrb[0].mxu0
      %607 = vmatprep.mubr.f32.mxu0 0.0
      %608 = vmatmul.mubr.f32.gmra.mrb[0].mxu0 %v326
      %v609 = vpop.f32.mrb[0].mxu0
      %v610 = vadd.f32 %v283, %v609
      %v611 = vpop.f32.mrb[0].mxu0
      %612 = vmatprep.mubr.f32.mxu0 0.0
      %613 = vmatmul.mubr.f32.gmra.mrb[0].mxu0 %v329
      %v614 = vpop.f32.mrb[0].mxu0
      %v615 = vadd.f32 %v283, %v614
      %v616 = vpop.f32.mrb[0].mxu0
      %617 = vmatprep.mubr.f32.mxu0 0.0
      %618 = vmatmul.mubr.f32.gmra.mrb[0].mxu0 %v332
      %v619 = vpop.f32.mrb[0].mxu0
      %v620 = vadd.f32 %v283, %v619
      %v621 = vpop.f32.mrb[0].mxu0
      %622 = vmatprep.mubr.f32.mxu0 0.0
      %623 = vmatmul.mubr.f32.gmra.mrb[0].mxu0 %v335
      %v624 = vpop.f32.mrb[0].mxu0
      %v625 = vadd.f32 %v283, %v624
      %v626 = vpop.f32.mrb[0].mxu0
      %627 = vmatprep.mubr.f32.mxu0 0.0
      %628 = vmatmul.mubr.f32.gmra.mrb[0].mxu0 %v338
      %v629 = vpop.f32.mrb[0].mxu0
      %v630 = vadd.f32 %v283, %v629
      %v631 = vpop.f32.mrb[0].mxu0
      %632 = vmatprep.mubr.f32.mxu0 0.0
      %633 = vmatmul.mubr.f32.gmra.mrb[0].mxu0 %v341
      %v634 = vpop.f32.mrb[0].mxu0
      %v635 = vadd.f32 %v283, %v634
      %v636 = vpop.f32.mrb[0].mxu0
      %637 = vmatprep.mubr.f32.mxu0 0.0
      %638 = vmatmul.mubr.f32.gmra.mrb[0].mxu0 %v344
      %v639 = vpop.f32.mrb[0].mxu0
      %v640 = vadd.f32 %v283, %v639
      %v641 = vpop.f32.mrb[0].mxu0
      %642 = vmatprep.mubr.f32.mxu0 0.0
      %643 = vmatmul.mubr.f32.gmra.mrb[0].mxu0 %v347
      %v644 = vpop.f32.mrb[0].mxu0
      %v645 = vadd.f32 %v283, %v644
      %v646 = vpop.f32.mrb[0].mxu0
      %647 = vmatprep.mubr.f32.mxu0 0.0
      %648 = vmatmul.mubr.f32.gmra.mrb[0].mxu0 %v350
      %v649 = vpop.f32.mrb[0].mxu0
      %v650 = vadd.f32 %v283, %v649
      %v651 = vpop.f32.mrb[0].mxu0
      %652 = vmatprep.mubr.f32.mxu0 0.0
      %653 = vmatmul.mubr.f32.gmra.mrb[0].mxu0 %v353
      %v654 = vpop.f32.mrb[0].mxu0
      %v655 = vadd.f32 %v283, %v654
      %v656 = vpop.f32.mrb[0].mxu0
      %657 = vmatprep.mubr.f32.mxu0 0.0
      %658 = vmatmul.mubr.f32.gmra.mrb[0].mxu0 %v356
      %v659 = vpop.f32.mrb[0].mxu0
      %v660 = vadd.f32 %v283, %v659
      %v661 = vpop.f32.mrb[0].mxu0
      %662 = vmatprep.mubr.f32.mxu0 0.0
      %663 = vmatmul.mubr.f32.gmra.mrb[0].mxu0 %v359
      %v664 = vpop.f32.mrb[0].mxu0
      %v665 = vadd.f32 %v283, %v664
      %v666 = vpop.f32.mrb[0].mxu0
      %667 = vmatprep.mubr.f32.mxu0 0.0
      %668 = vmatmul.mubr.f32.gmra.mrb[0].mxu0 %v362
      %v669 = vpop.f32.mrb[0].mxu0
      %v670 = vadd.f32 %v283, %v669
      %v671 = vpop.f32.mrb[0].mxu0
      %672 = vmatprep.mubr.f32.mxu0 0.0
      %673 = vmatmul.mubr.f32.gmra.mrb[0].mxu0 %v365
      %v674 = vpop.f32.mrb[0].mxu0
      %v675 = vadd.f32 %v283, %v674
      %v676 = vpop.f32.mrb[0].mxu0
      %677 = vmatprep.mubr.f32.mxu0 0.0
      %678 = vmatmul.mubr.f32.gmra.mrb[0].mxu0 %v368
      %v679 = vpop.f32.mrb[0].mxu0
      %v680 = vadd.f32 %v283, %v679
      %v681 = vpop.f32.mrb[0].mxu0
      %682 = vmatprep.mubr.f32.mxu0 0.0
      %683 = vmatmul.mubr.f32.gmra.mrb[0].mxu0 %v371
      %v684 = vpop.f32.mrb[0].mxu0
      %v685 = vadd.f32 %v283, %v684
      %v686 = vpop.f32.mrb[0].mxu0
      %687 = vmatprep.mubr.f32.mxu0 0.0
      %688 = vmatmul.mubr.f32.gmra.mrb[0].mxu0 %v374
      %v689 = vpop.f32.mrb[0].mxu0
      %v690 = vadd.f32 %v283, %v689
      %v691 = vpop.f32.mrb[0].mxu0
      %692 = vmatprep.mubr.f32.mxu0 0.0
      %693 = vmatmul.mubr.f32.gmra.mrb[0].mxu0 %v377
      %v694 = vpop.f32.mrb[0].mxu0
      %v695 = vadd.f32 %v283, %v694
      %v696 = vpop.f32.mrb[0].mxu0
      %697 = vmatprep.mubr.f32.mxu0 0.0
      %698 = vmatmul.mubr.f32.gmra.mrb[0].mxu0 %v380
      %v699 = vpop.f32.mrb[0].mxu0
      %v700 = vadd.f32 %v283, %v699
      %v701 = vpop.f32.mrb[0].mxu0
      %702 = vmatprep.mubr.f32.mxu0 0.0
      %703 = vmatmul.mubr.f32.gmra.mrb[0].mxu0 %v383
      %v704 = vpop.f32.mrb[0].mxu0
      %v705 = vadd.f32 %v283, %v704
      %v706 = vpop.f32.mrb[0].mxu0
      %707 = vmatprep.mubr.f32.mxu0 0.0
      %708 = vmatmul.mubr.f32.gmra.mrb[0].mxu0 %v386
      %v709 = vpop.f32.mrb[0].mxu0
      %v710 = vadd.f32 %v283, %v709
      %v711 = vpop.f32.mrb[0].mxu0
      %712 = vmatprep.mubr.f32.mxu0 0.0
      %713 = vmatmul.mubr.f32.gmra.mrb[0].mxu0 %v389
      %v714 = vpop.f32.mrb[0].mxu0
      %v715 = vadd.f32 %v283, %v714
      %v716 = vpop.f32.mrb[0].mxu0
      %717 = vmatprep.mubr.f32.mxu0 0.0
      %718 = vmatmul.mubr.f32.gmra.mrb[0].mxu0 %v392
      %v719 = vpop.f32.mrb[0].mxu0
      %v720 = vadd.f32 %v283, %v719
      %v721 = vpop.f32.mrb[0].mxu0
      %722 = vmatprep.mubr.f32.mxu0 0.0
      %723 = vmatmul.mubr.f32.gmra.mrb[0].mxu0 %v395
      %v724 = vpop.f32.mrb[0].mxu0
      %v725 = vadd.f32 %v283, %v724
      %v726 = vpop.f32.mrb[0].mxu0
      %727 = vmatprep.mubr.f32.mxu0 0.0
      %728 = vmatmul.mubr.f32.gmra.mrb[0].mxu0 %v398
      %v729 = vpop.f32.mrb[0].mxu0
      %v730 = vadd.f32 %v283, %v729
      %v731 = vpop.f32.mrb[0].mxu0
      %732 = vmatprep.mubr.f32.mxu0 0.0
      %733 = vmatmul.mubr.f32.gmra.mrb[0].mxu0 %v401
      %v734 = vpop.f32.mrb[0].mxu0
      %v735 = vadd.f32 %v283, %v734
      %v736 = vpop.f32.mrb[0].mxu0
      %737 = vmatprep.mubr.f32.mxu0 0.0
      %738 = vmatmul.mubr.f32.gmra.mrb[0].mxu0 %v404
      %v739 = vpop.f32.mrb[0].mxu0
      %v740 = vadd.f32 %v283, %v739
      %v741 = vpop.f32.mrb[0].mxu0
      %742 = vmatprep.mubr.f32.mxu0 0.0
      %743 = vmatmul.mubr.f32.gmra.mrb[0].mxu0 %v407
      %v744 = vpop.f32.mrb[0].mxu0
      %v745 = vadd.f32 %v283, %v744
      %v746 = vpop.f32.mrb[0].mxu0
      %747 = vmatprep.mubr.f32.mxu0 0.0
      %748 = vmatmul.mubr.f32.gmra.mrb[0].mxu0 %v410
      %v749 = vpop.f32.mrb[0].mxu0
      %v750 = vadd.f32 %v283, %v749
      %v751 = vpop.f32.mrb[0].mxu0
      %752 = vmatprep.mubr.f32.mxu0 0.0
      %753 = vmatmul.mubr.f32.gmra.mrb[0].mxu0 %v413
      %v754 = vpop.f32.mrb[0].mxu0
      %v755 = vadd.f32 %v283, %v754
      %v756 = vpop.f32.mrb[0].mxu0
      %757 = vmatprep.mubr.f32.mxu0 0.0
      %758 = vmatmul.mubr.f32.gmra.mrb[0].mxu0 %v416
      %v759 = vpop.f32.mrb[0].mxu0
      %v760 = vadd.f32 %v283, %v759
      %v761 = vpop.f32.mrb[0].mxu0
      %762 = vmatprep.mubr.f32.mxu0 0.0
      %763 = vmatmul.mubr.f32.gmra.mrb[0].mxu0 %v419
      %v764 = vpop.f32.mrb[0].mxu0
      %v765 = vadd.f32 %v283, %v764
      %v766 = vpop.f32.mrb[0].mxu0
      %767 = vmatprep.mubr.f32.mxu0 0.0
      %768 = vmatmul.mubr.f32.gmra.mrb[0].mxu0 %v422
      %v769 = vpop.f32.mrb[0].mxu0
      %v770 = vadd.f32 %v283, %v769
      %v771 = vpop.f32.mrb[0].mxu0
      %772 = vmatprep.mubr.f32.mxu0 0.0
      %773 = vmatmul.mubr.f32.gmra.mrb[0].mxu0 %v425
      %v774 = vpop.f32.mrb[0].mxu0
      %v775 = vadd.f32 %v283, %v774
      %v776 = vpop.f32.mrb[0].mxu0
      %777 = vmatprep.mubr.f32.mxu0 0.0
      %778 = vmatmul.mubr.f32.gmra.mrb[0].mxu0 %v428
      %v779 = vpop.f32.mrb[0].mxu0
      %v780 = vadd.f32 %v283, %v779
      %v781 = vpop.f32.mrb[0].mxu0
      %782 = vmatprep.mubr.f32.mxu0 0.0
      %783 = vmatmul.mubr.f32.gmra.mrb[0].mxu0 %v431
      %v784 = vpop.f32.mrb[0].mxu0
      %v785 = vadd.f32 %v283, %v784
      %v786 = vpop.f32.mrb[0].mxu0
      %787 = vmatprep.mubr.f32.mxu0 0.0
      %788 = vmatmul.mubr.f32.gmra.mrb[0].mxu0 %v434
      %v789 = vpop.f32.mrb[0].mxu0
      %v790 = vadd.f32 %v283, %v789
      %v791 = vpop.f32.mrb[0].mxu0
      %792 = vmatprep.mubr.f32.mxu0 0.0
      %793 = vmatmul.mubr.f32.gmra.mrb[0].mxu0 %v437
      %v794 = vpop.f32.mrb[0].mxu0
      %v795 = vadd.f32 %v283, %v794
      %v796 = vpop.f32.mrb[0].mxu0
      %797 = vmatprep.mubr.f32.mxu0 0.0
      %798 = vmatmul.mubr.f32.gmra.mrb[0].mxu0 %v440
      %v799 = vpop.f32.mrb[0].mxu0
      %v800 = vadd.f32 %v283, %v799
      %v801 = vpop.f32.mrb[0].mxu0
      %802 = vmatprep.mubr.f32.mxu0 0.0
      %803 = vmatmul.mubr.f32.gmra.mrb[0].mxu0 %v443
      %v804 = vpop.f32.mrb[0].mxu0
      %v805 = vadd.f32 %v283, %v804
      %v806 = vpop.f32.mrb[0].mxu0
      %807 = vmatprep.mubr.f32.mxu0 0.0
      %808 = vmatmul.mubr.f32.gmra.mrb[0].mxu0 %v446
      %v809 = vpop.f32.mrb[0].mxu0
      %v810 = vadd.f32 %v283, %v809
      %v811 = vpop.f32.mrb[0].mxu0
      %812 = vmatprep.mubr.f32.mxu0 0.0
      %813 = vmatmul.mubr.f32.gmra.mrb[0].mxu0 %v449
      %v814 = vpop.f32.mrb[0].mxu0
      %v815 = vadd.f32 %v283, %v814
      %v816 = vpop.f32.mrb[0].mxu0
      %817 = vmatprep.mubr.f32.mxu0 0.0
      %818 = vmatmul.mubr.f32.gmra.mrb[0].mxu0 %v452
      %v819 = vpop.f32.mrb[0].mxu0
      %v820 = vadd.f32 %v283, %v819
      %v821 = vpop.f32.mrb[0].mxu0
      %822 = vmatprep.mubr.f32.mxu0 0.0
      %823 = vmatmul.mubr.f32.gmra.mrb[0].mxu0 %v455
      %v824 = vpop.f32.mrb[0].mxu0
      %v825 = vadd.f32 %v283, %v824
      %v826 = vpop.f32.mrb[0].mxu0
      %827 = vmatprep.mubr.f32.mxu0 0.0
      %828 = vmatmul.mubr.f32.gmra.mrb[0].mxu0 %v458
      %v829 = vpop.f32.mrb[0].mxu0
      %v830 = vadd.f32 %v283, %v829
      %v831 = vpop.f32.mrb[0].mxu0
      %832 = vmatprep.mubr.f32.mxu0 0.0
      %833 = vmatmul.mubr.f32.gmra.mrb[0].mxu0 %v461
      %v834 = vpop.f32.mrb[0].mxu0
      %v835 = vadd.f32 %v283, %v834
      %v836 = vpop.f32.mrb[0].mxu0
      %837 = vmatprep.mubr.f32.mxu0 0.0
      %838 = vmatmul.mubr.f32.gmra.mrb[0].mxu0 %v464
      %v839 = vpop.f32.mrb[0].mxu0
      %v840 = vadd.f32 %v283, %v839
      %v841 = vpop.f32.mrb[0].mxu0
      %842 = vmatprep.mubr.f32.mxu0 0.0
      %843 = vmatmul.mubr.f32.gmra.mrb[0].mxu0 %v467
      %v844 = vpop.f32.mrb[0].mxu0
      %v845 = vadd.f32 %v283, %v844
      %v846 = vpop.f32.mrb[0].mxu0
      %847 = vmatprep.mubr.f32.mxu0 0.0
      %848 = vmatmul.mubr.f32.gmra.mrb[0].mxu0 %v470
      %v849 = vpop.f32.mrb[0].mxu0
      %v850 = vadd.f32 %v283, %v849
      %v851 = vpop.f32.mrb[0].mxu0
      %852 = vmatprep.mubr.f32.mxu0 0.0
      %853 = vmatmul.mubr.f32.gmra.mrb[0].mxu0 %v473
      %v854 = vpop.f32.mrb[0].mxu0
      %v855 = vadd.f32 %v283, %v854
      %v856 = vpop.f32.mrb[0].mxu0
      %857 = vmatprep.mubr.f32.mxu0 0.0
      %858 = vmatmul.mubr.f32.gmra.mrb[0].mxu0 %v476
      %v859 = vpop.f32.mrb[0].mxu0
      %v860 = vadd.f32 %v283, %v859
      %v861 = vpop.f32.mrb[0].mxu0
      %862 = vdwg.mxu0
      %v863 = vmax.f32 %v545, 0.0
      %v864 = vmax.f32 %v550, 0.0
      %v865 = vmax.f32 %v555, 0.0
      %v866 = vmax.f32 %v560, 0.0
      %v867 = vmax.f32 %v565, 0.0
      %v868 = vmax.f32 %v570, 0.0
      %v869 = vmax.f32 %v575, 0.0
      %v870 = vmax.f32 %v580, 0.0
      %v871 = vmax.f32 %v585, 0.0
      %v872 = vmax.f32 %v590, 0.0
      %v873 = vmax.f32 %v595, 0.0
      %v874 = vmax.f32 %v600, 0.0
      %v875 = vmax.f32 %v605, 0.0
      %v876 = vmax.f32 %v610, 0.0
      %v877 = vmax.f32 %v615, 0.0
      %v878 = vmax.f32 %v620, 0.0
      %v879 = vmax.f32 %v625, 0.0
      %v880 = vmax.f32 %v630, 0.0
      %v881 = vmax.f32 %v635, 0.0
      %v882 = vmax.f32 %v640, 0.0
      %v883 = vmax.f32 %v645, 0.0
      %v884 = vmax.f32 %v650, 0.0
      %v885 = vmax.f32 %v655, 0.0
      %v886 = vmax.f32 %v660, 0.0
      %v887 = vmax.f32 %v665, 0.0
      %v888 = vmax.f32 %v670, 0.0
      %v889 = vmax.f32 %v675, 0.0
      %v890 = vmax.f32 %v680, 0.0
      %v891 = vmax.f32 %v685, 0.0
      %v892 = vmax.f32 %v690, 0.0
      %v893 = vmax.f32 %v695, 0.0
      %v894 = vmax.f32 %v700, 0.0
      %v895 = vmax.f32 %v705, 0.0
      %v896 = vmax.f32 %v710, 0.0
      %v897 = vmax.f32 %v715, 0.0
      %v898 = vmax.f32 %v720, 0.0
      %v899 = vmax.f32 %v725, 0.0
      %v900 = vmax.f32 %v730, 0.0
      %v901 = vmax.f32 %v735, 0.0
      %v902 = vmax.f32 %v740, 0.0
      %v903 = vmax.f32 %v745, 0.0
      %v904 = vmax.f32 %v750, 0.0
      %v905 = vmax.f32 %v755, 0.0
      %v906 = vmax.f32 %v760, 0.0
      %v907 = vmax.f32 %v765, 0.0
      %v908 = vmax.f32 %v770, 0.0
      %v909 = vmax.f32 %v775, 0.0
      %v910 = vmax.f32 %v780, 0.0
      %v911 = vmax.f32 %v785, 0.0
      %v912 = vmax.f32 %v790, 0.0
      %v913 = vmax.f32 %v795, 0.0
      %v914 = vmax.f32 %v800, 0.0
      %v915 = vmax.f32 %v805, 0.0
      %v916 = vmax.f32 %v810, 0.0
      %v917 = vmax.f32 %v815, 0.0
      %v918 = vmax.f32 %v820, 0.0
      %v919 = vmax.f32 %v825, 0.0
      %v920 = vmax.f32 %v830, 0.0
      %v921 = vmax.f32 %v835, 0.0
      %v922 = vmax.f32 %v840, 0.0
      %v923 = vmax.f32 %v845, 0.0
      %v924 = vmax.f32 %v850, 0.0
      %v925 = vmax.f32 %v855, 0.0
      %v926 = vmax.f32 %v860, 0.0
      %927 = vst [vmem:[%s208] sm:$0xff] %v863
      %928 = vst [vmem:[%s208 + $0x8] sm:$0xff] %v864
      %929 = vst [vmem:[%s208 + $0x10] sm:$0xff] %v865
      %930 = vst [vmem:[%s208 + $0x18] sm:$0xff] %v866
      %931 = vst [vmem:[%s208 + $0x20] sm:$0xff] %v867
      %932 = vst [vmem:[%s208 + $0x28] sm:$0xff] %v868
      %933 = vst [vmem:[%s208 + $0x30] sm:$0xff] %v869
      %934 = vst [vmem:[%s208 + $0x38] sm:$0xff] %v870
      %935 = vst [vmem:[%s208 + $0x40] sm:$0xff] %v871
      %936 = vst [vmem:[%s208 + $0x48] sm:$0xff] %v872
      %937 = vst [vmem:[%s208 + $0x50] sm:$0xff] %v873
      %938 = vst [vmem:[%s208 + $0x58] sm:$0xff] %v874
      %939 = vst [vmem:[%s208 + $0x60] sm:$0xff] %v875
      %940 = vst [vmem:[%s208 + $0x68] sm:$0xff] %v876
      %941 = vst [vmem:[%s208 + $0x70] sm:$0xff] %v877
      %942 = vst [vmem:[%s208 + $0x78] sm:$0xff] %v878
      %943 = vst [vmem:[%s208 + $0x80] sm:$0xff] %v879
      %944 = vst [vmem:[%s208 + $0x88] sm:$0xff] %v880
      %945 = vst [vmem:[%s208 + $0x90] sm:$0xff] %v881
      %946 = vst [vmem:[%s208 + $0x98] sm:$0xff] %v882
      %947 = vst [vmem:[%s208 + $0xa0] sm:$0xff] %v883
      %948 = vst [vmem:[%s208 + $0xa8] sm:$0xff] %v884
      %949 = vst [vmem:[%s208 + $0xb0] sm:$0xff] %v885
      %950 = vst [vmem:[%s208 + $0xb8] sm:$0xff] %v886
      %951 = vst [vmem:[%s208 + $0xc0] sm:$0xff] %v887
      %952 = vst [vmem:[%s208 + $0xc8] sm:$0xff] %v888
      %953 = vst [vmem:[%s208 + $0xd0] sm:$0xff] %v889
      %954 = vst [vmem:[%s208 + $0xd8] sm:$0xff] %v890
      %955 = vst [vmem:[%s208 + $0xe0] sm:$0xff] %v891
      %956 = vst [vmem:[%s208 + $0xe8] sm:$0xff] %v892
      %957 = vst [vmem:[%s208 + $0xf0] sm:$0xff] %v893
      %958 = vst [vmem:[%s208 + $0xf8] sm:$0xff] %v894
      %959 = vst [vmem:[%s208 + $0x100] sm:$0xff] %v895
      %960 = vst [vmem:[%s208 + $0x108] sm:$0xff] %v896
      %961 = vst [vmem:[%s208 + $0x110] sm:$0xff] %v897
      %962 = vst [vmem:[%s208 + $0x118] sm:$0xff] %v898
      %963 = vst [vmem:[%s208 + $0x120] sm:$0xff] %v899
      %964 = vst [vmem:[%s208 + $0x128] sm:$0xff] %v900
      %965 = vst [vmem:[%s208 + $0x130] sm:$0xff] %v901
      %966 = vst [vmem:[%s208 + $0x138] sm:$0xff] %v902
      %967 = vst [vmem:[%s208 + $0x140] sm:$0xff] %v903
      %968 = vst [vmem:[%s208 + $0x148] sm:$0xff] %v904
      %969 = vst [vmem:[%s208 + $0x150] sm:$0xff] %v905
      %970 = vst [vmem:[%s208 + $0x158] sm:$0xff] %v906
      %971 = vst [vmem:[%s208 + $0x160] sm:$0xff] %v907
      %972 = vst [vmem:[%s208 + $0x168] sm:$0xff] %v908
      %973 = vst [vmem:[%s208 + $0x170] sm:$0xff] %v909
      %974 = vst [vmem:[%s208 + $0x178] sm:$0xff] %v910
      %975 = vst [vmem:[%s208 + $0x180] sm:$0xff] %v911
      %976 = vst [vmem:[%s208 + $0x188] sm:$0xff] %v912
      %977 = vst [vmem:[%s208 + $0x190] sm:$0xff] %v913
      %978 = vst [vmem:[%s208 + $0x198] sm:$0xff] %v914
      %979 = vst [vmem:[%s208 + $0x1a0] sm:$0xff] %v915
      %980 = vst [vmem:[%s208 + $0x1a8] sm:$0xff] %v916
      %981 = vst [vmem:[%s208 + $0x1b0] sm:$0xff] %v917
      %982 = vst [vmem:[%s208 + $0x1b8] sm:$0xff] %v918
      %983 = vst [vmem:[%s208 + $0x1c0] sm:$0xff] %v919
      %984 = vst [vmem:[%s208 + $0x1c8] sm:$0xff] %v920
      %985 = vst [vmem:[%s208 + $0x1d0] sm:$0xff] %v921
      %986 = vst [vmem:[%s208 + $0x1d8] sm:$0xff] %v922
      %987 = vst [vmem:[%s208 + $0x1e0] sm:$0xff] %v923
      %988 = vst [vmem:[%s208 + $0x1e8] sm:$0xff] %v924
      %989 = vst [vmem:[%s208 + $0x1f0] sm:$0xff] %v925
      %990 = vst [vmem:[%s208 + $0x1f8] sm:$0xff] %v926
      %s991 = smul.u32 64, %s19
      %p992 = scmp.lt.s32.totalorder %s18, 1
      %s993 = scalar_select %p992, %s18, 1
      %p994 = scmp.lt.s32.totalorder %s991, 63
      %s995 = scalar_select %p994, %s991, 63
      %s996 = smul.addr %s993, 64
      %s997 = sadd.s32 %s995, %s996
      %s998 = smul.addr %s997, 8
      %s999 = scalar_lea.vmem %s3, %s998
      // Predicated region
      $region33: #{deconv3d_block.1} parent=31 // pred_check
        %p1000 = pneg %p116
      $region34: #{deconv3d_block.1} parent=31 // pred_check_branch
        %1002 = sbr.rel (%p1000) target = $region36
      $region35: #{deconv3d_block.1} parent=31 // pred_region
        %s1003 = smul.u32 64, %s19
      $region36: #{deconv3d_block.1} parent=31 // pred_fallthru
        _
    $region32: #{deconv3d_block.1} parent=5 // pred_fallthru
      _
    %p1004 = scmp.le.s32.totalorder 2, %s9
    // Predicated region
    $region37: #{deconv3d_block.1} parent=5 // pred_check
      %p1005 = pneg %p1004
    $region38: #{deconv3d_block.1} parent=5 // pred_check_branch
      %1007 = sbr.rel (%p1005) target = $region40
    $region39: #{deconv3d_block.1} parent=5 // pred_region
      %s1008 = ssub.s32 %s9, 2
      // Predicated region
      $region41: #{deconv3d_block.1} parent=39 // pred_check
        %p1009 = pneg %p122
      $region42: #{deconv3d_block.1} parent=39 // pred_check_branch
        %1011 = sbr.rel (%p1009) target = $region44
      $region43: #{deconv3d_block.1} parent=39 // pred_region
        %s1012 = smul.u32 64, %s21
        %p1013 = scmp.lt.s32.totalorder %s20, 1
        %s1014 = scalar_select %p1013, %s20, 1
        %p1015 = scmp.lt.s32.totalorder %s1012, 63
        %s1016 = scalar_select %p1015, %s1012, 63
        %s1017 = smul.addr %s1014, 64
        %s1018 = sadd.s32 %s1016, %s1017
        %s1019 = smul.addr %s1018, 8
        %s1020 = scalar_lea.vmem %s3, %s1019
      $region44: #{deconv3d_block.1} parent=39 // pred_fallthru
        _
    $region40: #{deconv3d_block.1} parent=5 // pred_fallthru
      _
  $region6: #{deconv3d_block.1} parent=0 // loop_footer
    %s13 = sadd.s32 1, %s9
  $region7: #{deconv3d_block.1} parent=0 // loop_footer_branch
    %8 = sbr.rel target = $region3
  $region8: #{deconv3d_block.1} parent=0 // loop_exit
    _

</llo_original>
